<compile_context>
chip_gen: v7x
topology: tpu7x:2x2x1
jax: 0.10.0
libtpu: 0.0.40
codegen_flags: <defaults>
</compile_context>

<pallas_src>
import jax
import jax.numpy as jnp
from jax.experimental import pallas as pl
from jax.experimental.pallas import tpu as pltpu


def _copy_kernel(x_ref, o_ref):
    # Pure copy of the current block; "view" semantics are a shape change only.
    o_ref[...] = x_ref[...]


# Prefer wide, lane-dense slabs (large multiples of 128 avoid masked vst).
_LANE_CANDIDATES = (32768, 16384, 8192, 4096, 2048, 1024, 512, 256, 128)


def _chip_tuning():
    """(target_block_bytes, vmem_limit_bytes) tuned per TPU generation."""
    try:
        kind = jax.devices()[0].device_kind.lower()
    except Exception:
        kind = ""
    if "v7" in kind:
        # 8 MiB blocks: 4 buffers x 8 MiB = 32 MiB << 64 MiB physical VMEM.
        return 8 * 1024 * 1024, 48 * 1024 * 1024
    # v5e / v6e (128 MiB physical): 4 MiB blocks, 32 MiB scoped limit.
    return 4 * 1024 * 1024, 32 * 1024 * 1024


def _sublane_multiple(dtype):
    """Native packed-tile row multiple: 8 for f32, 16 for bf16/f16, 32 for 8-bit."""
    itemsize = jnp.dtype(dtype).itemsize
    return max(8, (4 // max(1, itemsize)) * 8)


def _pick_block_rows(rows, block_rows, sublane_mult):
    """Prefer a block_rows that divides rows evenly (no masked tail); bounded search."""
    if rows % block_rows == 0:
        return block_rows
    cand = block_rows
    for _ in range(64):
        cand -= sublane_mult
        if cand < sublane_mult:
            break
        if rows % cand == 0:
            return cand
    return block_rows


def view_forward(x, *, materialize=False):
    """Equivalent of torch `x.view(x.size(0), -1)`.

    materialize=False (default) returns the zero-cost metadata reshape.
    materialize=True routes the bytes through a Pallas copy kernel.
    """
    b = x.shape[0]
    f = 1
    for d in x.shape[1:]:
        f *= d

    # Row-major flatten of trailing dims (metadata-only reshape = glue).
    x2d = jnp.reshape(x, (b, f))

    if not materialize:
        return x2d

    total = b * f
    if total == 0:
        return x2d

    itemsize = jnp.dtype(x.dtype).itemsize
    sublane_mult = _sublane_multiple(x.dtype)
    target_bytes, vmem_limit = _chip_tuning()

    cost = pl.CostEstimate(flops=0, transcendentals=0,
                           bytes_accessed=2 * total * itemsize)

    # --- Main path: re-view as a lane-dense (rows, lane) slab. ---------------
    lane = None
    for cand in _LANE_CANDIDATES:
        if total % cand == 0:
            lane = cand
            break

    if lane is not None:
        rows = total // lane
        x_slab = jnp.reshape(x2d, (rows, lane))          # metadata reshape

        block_rows = (target_bytes // (lane * itemsize)) // sublane_mult * sublane_mult
        block_rows = max(sublane_mult, block_rows)
        if block_rows >= rows:
            if rows >= 2 * sublane_mult:
                # Keep >=2 grid steps so v7x's two TensorCores can both stream.
                block_rows = max(sublane_mult,
                                 (rows // 2) // sublane_mult * sublane_mult)
            else:
                block_rows = rows                         # block == full dim (exempt)
        if block_rows < rows:
            block_rows = _pick_block_rows(rows, block_rows, sublane_mult)

        grid = (pl.cdiv(rows, block_rows),)               # ragged tail masked
        out_slab = pl.pallas_call(
            _copy_kernel,
            out_shape=jax.ShapeDtypeStruct((rows, lane), x.dtype),
            grid_spec=pltpu.PrefetchScalarGridSpec(
                num_scalar_prefetch=0,
                grid=grid,
                in_specs=[pl.BlockSpec((block_rows, lane), lambda i: (i, 0))],
                out_specs=pl.BlockSpec((block_rows, lane), lambda i: (i, 0)),
            ),
            compiler_params=pltpu.CompilerParams(
                dimension_semantics=("parallel",),
                vmem_limit_bytes=vmem_limit,
            ),
            cost_estimate=cost,
        )(x_slab)
        return jnp.reshape(out_slab, (b, f))              # metadata reshape

    # --- Fallback: total not a multiple of 128. -------------------------------
    # Tile BOTH axes so per-block VMEM is bounded: block_b rows x block_f
    # (multiple-of-128) columns, ragged tails masked by Pallas.
    block_b = b if b <= sublane_mult else sublane_mult
    max_f_elems = max(1, target_bytes // (block_b * itemsize))

    if max_f_elems >= f:
        # Whole feature axis fits in one bounded block (block == full dim exempt).
        grid = (pl.cdiv(b, block_b),)
        return pl.pallas_call(
            _copy_kernel,
            out_shape=jax.ShapeDtypeStruct((b, f), x.dtype),
            grid_spec=pltpu.PrefetchScalarGridSpec(
                num_scalar_prefetch=0,
                grid=grid,
                in_specs=[pl.BlockSpec((block_b, f), lambda i: (i, 0))],
                out_specs=pl.BlockSpec((block_b, f), lambda i: (i, 0)),
            ),
            compiler_params=pltpu.CompilerParams(
                dimension_semantics=("parallel",),
                vmem_limit_bytes=vmem_limit,
            ),
            cost_estimate=cost,
        )(x2d)

    block_f = max(128, (max_f_elems // 128) * 128)        # lane-dense, bounded
    grid = (pl.cdiv(b, block_b), pl.cdiv(f, block_f))
    return pl.pallas_call(
        _copy_kernel,
        out_shape=jax.ShapeDtypeStruct((b, f), x.dtype),
        grid_spec=pltpu.PrefetchScalarGridSpec(
            num_scalar_prefetch=0,
            grid=grid,
            in_specs=[pl.BlockSpec((block_b, block_f), lambda i, j: (i, j))],
            out_specs=pl.BlockSpec((block_b, block_f), lambda i, j: (i, j)),
        ),
        compiler_params=pltpu.CompilerParams(
            dimension_semantics=("parallel", "parallel"),
            vmem_limit_bytes=vmem_limit,
        ),
        cost_estimate=cost,
    )(x2d)


if __name__ == "__main__":
    key = jax.random.PRNGKey(0)

    # Small NCHW input: batch=2, channels=4, spatial=16x16 -> flatten to (2, 1024)
    x = jax.random.normal(key, (2, 4, 16, 16), dtype=jnp.float32)

    # Pallas copy path (main lane-dense slab branch).
    out = jax.block_until_ready(view_forward(x, materialize=True))
    ref = jnp.reshape(x, (x.shape[0], -1))
    assert out.shape == (2, 4 * 16 * 16), out.shape
    assert out.dtype == x.dtype
    assert bool(jnp.all(out == ref))

    # Zero-cost (default, non-materializing) path agrees.
    out_view = jax.block_until_ready(view_forward(x))
    assert bool(jnp.all(out_view == ref))

    # Exercise the non-128-multiple fallback branch too.
    y = jax.random.normal(key, (2, 5, 7), dtype=jnp.float32)
    out_y = jax.block_until_ready(view_forward(y, materialize=True))
    ref_y = jnp.reshape(y, (y.shape[0], -1))
    assert out_y.shape == (2, 35)
    assert bool(jnp.all(out_y == ref_y))

    print("KERNEL_OK")
</pallas_src>

<mosaic_0001>
module attributes {stable_mosaic.version = 11 : i64} {
  func.func @_copy_kernel(%arg0: i32, %arg1: memref<1x2048xf32, #tpu.memory_space<vmem>>, %arg2: memref<1x2048xf32, #tpu.memory_space<vmem>>) attributes {dimension_semantics = [#tpu.dimension_semantics<parallel>], iteration_bounds = array<i64: 1>, scalar_prefetch = 0 : i64, scratch_operands = 0 : i64, tpu.core_type = #tpu.core_type<tc>, window_params = [{transform_indices = @transform_0, window_bounds = array<i64: 1, 2048>}, {transform_indices = @transform_1, window_bounds = array<i64: 1, 2048>}]} {
    %c0 = arith.constant 0 : index
    %c0_0 = arith.constant 0 : index
    %0 = vector.load %arg1[%c0, %c0_0] : memref<1x2048xf32, #tpu.memory_space<vmem>>, vector<1x2048xf32>
    %c0_1 = arith.constant 0 : index
    %c0_2 = arith.constant 0 : index
    %1 = vector.load %arg2[%c0_1, %c0_2] : memref<1x2048xf32, #tpu.memory_space<vmem>>, vector<1x2048xf32>
    tpu.vector_store %arg2[%c0_1, %c0_2], %0 {strides = array<i32>} : memref<1x2048xf32, #tpu.memory_space<vmem>>, vector<1x2048xf32>,
    return
  }
  func.func @transform_0(%arg0: i32) -> (i32, i32) {
    %c0_i32 = arith.constant 0 : i32
    %c0_i32_0 = arith.constant 0 : i32
    return %arg0, %c0_i32 : i32, i32
  }
  func.func @transform_1(%arg0: i32) -> (i32, i32) {
    %c0_i32 = arith.constant 0 : i32
    %c0_i32_0 = arith.constant 0 : i32
    return %arg0, %c0_i32 : i32, i32
  }
}

</mosaic_0001>

<llo_original>
// kernel: tpu_custom_call.1
$region0: #{tpu_custom_call.1}
  #allocation0 [shape = 'u32[]', space=smem, size = 0x4, offset = 0x4, fixed_abs, tag = 'smem constant byte address 0x4 - core index']
  #allocation1 [shape = 'u32[144,128]{1,0:T(1,128)}', space=vmem, size = 0x12000, scoped, tag = 'internal scratch']
  %s0 = inlined_call_operand.hbm [shape: f32[1,2048], index: 0, kind: input, shape index: {}]
  %s1 = inlined_call_operand.hbm [shape: f32[1,2048], index: 1, kind: output, shape index: {}]
  %s2 = sld [smem:[#allocation0]]
  $region18: #{tpu_custom_call.1} parent=0
    _
  %s4 = ssub.s32 1, %s2
  %s5 = scalar_select 0, %s4, %s2
  $region1: #{tpu_custom_call.1} parent=0
    #allocation2 [shape = 'u8[8192]{0}', space=vmem, size = 0x2000, scoped, tag = 'input window, operand 0, single buffered']
    #allocation3 [shape = 's32[1]{0}', space=sflag, size = 0x4, scoped, tag = 'scoped memory for tpu_custom_call.1']
    #allocation4 [shape = 's32[1]{0}', space=sflag, size = 0x4, scoped, tag = 'scoped memory for tpu_custom_call.1']
    #allocation5 [shape = 'u8[8192]{0}', space=vmem, size = 0x2000, scoped, tag = 'output window, operand 0, single buffered']
    %6 = vsyncpa [#allocation3], 0
    %7 = vsyncpa [#allocation4], 0
    // Predicated region
    $region2: #{tpu_custom_call.1} parent=1 // pred_check
      _
    $region3: #{tpu_custom_call.1} parent=1 // pred_check_branch
      %9 = sbr.rel (0) target = $region5
    $region4: #{tpu_custom_call.1} parent=1 // pred_region
      %s11 = ssub.s32 256, 256
      %12 = vsyncadd [#allocation3], %s11
      %s14 = sshll.u32 [#allocation2], 4
      %s15 = int_to_ptr.vmem [resolvable:$true] %s14
      %17 = dma.hbm_to_vmem [thread:$0]  %s0, 256, %s15, [#allocation3]
    $region5: #{tpu_custom_call.1} parent=1 // pred_fallthru
      _
    // Predicated region
    $region6: #{tpu_custom_call.1} parent=1 // pred_check
      _
    $region7: #{tpu_custom_call.1} parent=1 // pred_check_branch
      %19 = sbr.rel (0) target = $region9
    $region8: #{tpu_custom_call.1} parent=1 // pred_region
      %20 = dma.done [#allocation3], 256
    $region9: #{tpu_custom_call.1} parent=1 // pred_fallthru
      _
    %v21 = vld [vmem:[#allocation2] sm:$0xff]
    %v22 = vld [vmem:[#allocation2 + $0x8] sm:$0xff]
    %23 = vst [vmem:[#allocation5] sm:$0xff] %v21
    %24 = vst [vmem:[#allocation5 + $0x8] sm:$0xff] %v22
    // Predicated region
    $region10: #{tpu_custom_call.1} parent=1 // pred_check
      _
    $region11: #{tpu_custom_call.1} parent=1 // pred_check_branch
      %26 = sbr.rel (0) target = $region13
    $region12: #{tpu_custom_call.1} parent=1 // pred_region
      %s28 = ssub.s32 256, 256
      %29 = vsyncadd [#allocation4], %s28
      %s31 = sshll.u32 [#allocation5], 4
      %s32 = int_to_ptr.vmem [resolvable:$true] %s31
      %34 = dma.vmem_to_hbm [thread:$0]  %s32, 256, %s1, [#allocation4]
    $region13: #{tpu_custom_call.1} parent=1 // pred_fallthru
      _
    // Predicated region
    $region14: #{tpu_custom_call.1} parent=1 // pred_check
      _
    $region15: #{tpu_custom_call.1} parent=1 // pred_check_branch
      %36 = sbr.rel (0) target = $region17
    $region16: #{tpu_custom_call.1} parent=1 // pred_region
      %37 = dma.done [#allocation4], 256
    $region17: #{tpu_custom_call.1} parent=1 // pred_fallthru
      _
    %38 = vsyncpa [#allocation3], 1
    %39 = vsyncpa [#allocation4], 1

</llo_original>
